<compile_context>
chip_gen: v7x
topology: tpu7x:2x2x1
jax: 0.10.0
libtpu: 0.0.40
codegen_flags: <defaults>
</compile_context>

<pallas_src>
import numpy as np
import jax
import jax.numpy as jnp
from jax.experimental import pallas as pl
from jax.experimental.pallas import tpu as pltpu

DENSE_NUM = 13
SPARSE_NUM = 26
EMB_DIM = 8
FEATURE_NUM = DENSE_NUM + SPARSE_NUM * EMB_DIM   # 221 (matches hard-coded 221)
FIELD_NUM = DENSE_NUM + SPARSE_NUM               # 39  (matches hard-coded 39)
NCOL = EMB_DIM + 1                               # 8 field-vector cols + 1 linear col


def feature_to_field(n: int) -> int:
    return n if n < DENSE_NUM else (n - DENSE_NUM) // EMB_DIM + DENSE_NUM


def _round_up(a: int, b: int) -> int:
    return (a + b - 1) // b * b


def _cdiv(a: int, b: int) -> int:
    return (a + b - 1) // b


def _plan_tiles(B: int, tb: int):
    # 128-aligned padded batch so the (1, TB) output tile is a full-lane unmasked store.
    b128 = _round_up(max(B, 1), 128)
    tb_cap = max(128, (tb // 128) * 128)
    ntiles = _cdiv(b128, tb_cap)
    # v7x has 2 TensorCores; give the 'parallel' grid axis >= 2 steps for non-trivial B.
    if b128 >= 512:
        ntiles = max(ntiles, 2)
    tb_eff = _round_up(_cdiv(b128, ntiles), 128)   # near-equal, 128-aligned tiles
    return tb_eff, ntiles, tb_eff * ntiles


# ----------------------------- Pallas kernel --------------------------------
def ffm_kernel(dense_ref, ids_ref, ud_ref, rep_ref, vt_ref, bias_ref, out_ref):
    # dense_ref: (TB, 13)   f32   raw dense features
    # ids_ref:   (TB, 27)   bf16  26 sparse ids (small ints, exact) + constant 1.0 column
    # ud_ref:    (13, 9)    f32   dense rows of [U | lin_w]
    # rep_ref:   (27, SV)   bf16  rows 0..25: 0/1 slot replication; row 26: -tile(iota(V))
    # vt_ref:    (SV, 18)   bf16  pre-contracted tables, hi|lo bf16 split of f32 values
    # bias_ref:  (1,)  SMEM f32   linear bias
    # out_ref:   (1, TB)    f32   lane-dense sigmoid output
    #
    # Note: this kernel is not HBM-bound; it is VALU / VMEM-ld-st / MXU-pass bound on
    # the (TB, SV) one-hot pipeline, hence the bf16 packing + folded-iota compare below.

    # z[:, :8] = own-field vectors weighted by dense features; z[:, 8] = linear term.
    z = jnp.dot(dense_ref[...], ud_ref[...], preferred_element_type=jnp.float32)   # (TB, 9)

    # Embedding "gather" on the MXU: rep[b, s*V + v] = id_s[b] - v.
    # Exact: ids and v are small integers (< 256 in bf16), bf16 products are exact,
    # accumulation is f32 -> the one-hot is a single equality compare against zero.
    rep = jnp.dot(ids_ref[...], rep_ref[...], preferred_element_type=jnp.float32)  # (TB, SV)
    onehot = (rep == 0.0).astype(jnp.bfloat16)                                     # (TB, SV)

    # Gather the pre-contracted rows.  vt holds hi|lo bf16 halves of the f32 table so a
    # single bf16 MXU pass keeps ~f32 precision (onehot is exact 0/1, so the two halves
    # add back to the original f32 values).
    zg = jnp.dot(onehot, vt_ref[...], preferred_element_type=jnp.float32)          # (TB, 18)
    z = z + zg[:, :NCOL] + zg[:, NCOL:]                                            # (TB, 9)

    # Square the 8 embedding columns, keep the linear column (index 8) as-is ...
    col = jax.lax.broadcasted_iota(jnp.int32, z.shape, 1)
    zq = z * jnp.where(col == EMB_DIM, 1.0, z)                                     # (TB, 9)
    # ... and reduce the 9 columns into a lane-dense (1, TB) row with a trans-B
    # dot_general (contraction over both operands' last dim) so stores stay unmasked.
    ones_lhs = jnp.ones((8, NCOL), jnp.float32)
    rows = jax.lax.dot_general(ones_lhs, zq, (((1,), (1,)), ((), ())),
                               preferred_element_type=jnp.float32)                 # (8, TB)
    out_ref[...] = jax.nn.sigmoid(rows[0:1, :] + bias_ref[0])                      # (1, TB)


# ------------------------------- wrapper -------------------------------------
def ffm_forward(x, emb_tables, field_matrix, lin_w, lin_b, *, tb=2048):
    """x: (B, 39) float32 — first 13 dense cols, last 26 cols are sparse ids (as floats)."""
    B = x.shape[0]
    assert x.shape[1] == FIELD_NUM

    # --- tiny O(params) precomputation in plain JAX (no O(B*221) intermediates) ---
    fields = np.array([feature_to_field(n) for n in range(FEATURE_NUM)], dtype=np.int32)
    u = field_matrix[jnp.arange(FEATURE_NUM), fields, :]                      # (221, 8)
    u_aug = jnp.concatenate([u, lin_w.reshape(FEATURE_NUM, 1)], axis=1)       # (221, 9)
    ud = u_aug[:DENSE_NUM]                                                    # (13, 9)

    vocabs = [int(t.shape[0]) for t in emb_tables]
    V = max(vocabs)
    # TODO(synk): for large vocabularies (V >~ a few hundred) switch the gather to a
    # per-slot loop instead of the flat (TB, 26*V) one-hot layout (VMEM is O(TB*26*V)),
    # which matters first on v7x's 64 MiB VMEM.
    vt_blocks = []
    for s in range(SPARSE_NUM):
        rows = u_aug[DENSE_NUM + s * EMB_DIM: DENSE_NUM + (s + 1) * EMB_DIM]  # (8, 9)
        vt = emb_tables[s] @ rows                                             # (vocab_s, 9)
        vt_blocks.append(jnp.pad(vt, ((0, V - vocabs[s]), (0, 0))))
    vt_f32 = jnp.concatenate(vt_blocks, axis=0)                               # (26*V, 9) f32
    vt_hi = vt_f32.astype(jnp.bfloat16)
    vt_lo = (vt_f32 - vt_hi.astype(jnp.float32)).astype(jnp.bfloat16)
    vt_hl = jnp.concatenate([vt_hi, vt_lo], axis=1)                           # (26*V, 18) bf16

    SV = SPARSE_NUM * V
    # ids / iota targets are exact in bf16 only below 256; fall back to f32 otherwise.
    rep_dtype = jnp.bfloat16 if V <= 256 else jnp.float32
    rep_np = np.zeros((SPARSE_NUM + 1, SV), dtype=np.float32)
    for s in range(SPARSE_NUM):
        rep_np[s, s * V:(s + 1) * V] = 1.0
    rep_np[SPARSE_NUM, :] = -np.tile(np.arange(V, dtype=np.float32), SPARSE_NUM)
    rep_mat = jnp.asarray(rep_np).astype(rep_dtype)                           # (27, 26*V)

    # --- batch tiling: 128-aligned lane-dense tiles, minimal pad waste, >=2 tiles ---
    tb_eff, ntiles, bp = _plan_tiles(B, tb)

    dense = x[:, :DENSE_NUM]
    ids = x[:, DENSE_NUM:]
    if bp != B:
        # padded rows: zeros -> id 0 (valid row); their outputs are sliced off below.
        dense = jnp.pad(dense, ((0, bp - B), (0, 0)))
        ids = jnp.pad(ids, ((0, bp - B), (0, 0)))
    ids_ext = jnp.concatenate(
        [ids, jnp.ones((bp, 1), jnp.float32)], axis=1).astype(rep_dtype)      # (bp, 27)

    out = pl.pallas_call(
        ffm_kernel,
        out_shape=jax.ShapeDtypeStruct((1, bp), jnp.float32),
        grid_spec=pltpu.PrefetchScalarGridSpec(
            num_scalar_prefetch=0,
            grid=(ntiles,),
            in_specs=[
                pl.BlockSpec((tb_eff, DENSE_NUM), lambda b: (b, 0)),          # dense tile
                pl.BlockSpec((tb_eff, SPARSE_NUM + 1), lambda b: (b, 0)),     # ids + ones col
                pl.BlockSpec((DENSE_NUM, NCOL), lambda b: (0, 0)),            # dense [U | w]
                pl.BlockSpec((SPARSE_NUM + 1, SV), lambda b: (0, 0)),         # id - v matrix
                pl.BlockSpec((SV, 2 * NCOL), lambda b: (0, 0)),               # contracted tables
                pl.BlockSpec(memory_space=pltpu.MemorySpace.SMEM),            # linear bias
            ],
            out_specs=pl.BlockSpec((1, tb_eff), lambda b: (0, b)),
        ),
        compiler_params=pltpu.CompilerParams(
            dimension_semantics=("parallel",)),
    )(dense, ids_ext, ud, rep_mat, vt_hl, lin_b)
    return out.reshape(-1)[:B]                                                # (B,)


# ------------------------- pure-JAX reference (literal) ---------------------
def ffm_reference(x, emb_tables, field_matrix, lin_w, lin_b):
    dense = x[:, :DENSE_NUM]
    sparse_ids = x[:, DENSE_NUM:].astype(jnp.int32)
    embs = [emb_tables[i][sparse_ids[:, i]] for i in range(SPARSE_NUM)]
    af = jnp.concatenate([dense] + embs, axis=1)                     # (B, 221)
    fields = np.array([feature_to_field(n) for n in range(FEATURE_NUM)])
    u = field_matrix[np.arange(FEATURE_NUM), fields, :]              # (221, 8)
    W = u @ u.T                                                      # <U_i, U_p>
    quad = jnp.einsum('bi,ip,bp->b', af, W, af)
    lin = af @ lin_w.T + lin_b                                       # (B, 1)
    return jax.nn.sigmoid(lin[:, 0] + quad)


# --------------------------------- main --------------------------------------
if __name__ == "__main__":
    key = jax.random.PRNGKey(0)
    B = 20                                                           # small, exercises padding
    feature_columns = [5 + (i % 7) for i in range(SPARSE_NUM)]       # per-sparse vocab sizes

    keys = jax.random.split(key, SPARSE_NUM + 5)
    emb_tables = [
        jax.random.normal(keys[i], (feature_columns[i], EMB_DIM), dtype=jnp.float32)
        for i in range(SPARSE_NUM)
    ]
    # modest scales keep the logits out of deep sigmoid saturation -> meaningful check
    field_matrix = 0.05 * jax.random.normal(
        keys[SPARSE_NUM], (FEATURE_NUM, FIELD_NUM, EMB_DIM), dtype=jnp.float32)
    lin_w = 0.05 * jax.random.normal(
        keys[SPARSE_NUM + 1], (1, FEATURE_NUM), dtype=jnp.float32)
    lin_b = 0.05 * jax.random.normal(keys[SPARSE_NUM + 2], (1,), dtype=jnp.float32)

    # input x: (B, 39) float32 — 13 dense floats + 26 sparse ids (stored as float)
    dense_x = jax.random.normal(keys[SPARSE_NUM + 3], (B, DENSE_NUM), dtype=jnp.float32)
    u01 = jax.random.uniform(keys[SPARSE_NUM + 4], (B, SPARSE_NUM), dtype=jnp.float32)
    vocab = jnp.array(feature_columns, dtype=jnp.float32)
    sparse_x = jnp.floor(u01 * vocab)
    x = jnp.concatenate([dense_x, sparse_x], axis=1)

    out = ffm_forward(x, emb_tables, field_matrix, lin_w, lin_b)
    out = jax.block_until_ready(out)

    # sanity check vs. the literal pairwise formulation
    ref = np.asarray(ffm_reference(x, emb_tables, field_matrix, lin_w, lin_b))
    assert out.shape == (B,)
    assert np.allclose(np.asarray(out), ref, rtol=2e-3, atol=2e-3), "mismatch vs reference"

    # final `.to(dtype=torch.double)` of the PyTorch module: dtype-only glue,
    # done host-side (TPU kernels have no native f64).
    out_double = np.asarray(out).astype(np.float64)
    assert out_double.dtype == np.float64 and out_double.shape == (B,)

    print("KERNEL_OK")
</pallas_src>

<mosaic_0001>
module attributes {stable_mosaic.version = 11 : i64} {
  func.func @ffm_kernel(%arg0: i32, %arg1: memref<128x13xf32, #tpu.memory_space<vmem>>, %arg2: memref<128x27xbf16, #tpu.memory_space<vmem>>, %arg3: memref<13x9xf32, #tpu.memory_space<vmem>>, %arg4: memref<27x286xbf16, #tpu.memory_space<vmem>>, %arg5: memref<286x18xbf16, #tpu.memory_space<vmem>>, %arg6: memref<1xf32, #tpu.memory_space<smem>>, %arg7: memref<1x128xf32, #tpu.memory_space<vmem>>) attributes {dimension_semantics = [#tpu.dimension_semantics<parallel>], iteration_bounds = array<i64: 1>, scalar_prefetch = 0 : i64, scratch_operands = 0 : i64, tpu.core_type = #tpu.core_type<tc>, window_params = [{transform_indices = @transform_0, window_bounds = array<i64: 128, 13>}, {transform_indices = @transform_1, window_bounds = array<i64: 128, 27>}, {pipeline_mode = #tpu.pipeline_mode<synchronous>, transform_indices = @transform_2, window_bounds = array<i64: 13, 9>}, {pipeline_mode = #tpu.pipeline_mode<synchronous>, transform_indices = @transform_3, window_bounds = array<i64: 27, 286>}, {pipeline_mode = #tpu.pipeline_mode<synchronous>, transform_indices = @transform_4, window_bounds = array<i64: 286, 18>}, {transform_indices = @transform_5, window_bounds = array<i64: 1>}, {transform_indices = @transform_6, window_bounds = array<i64: 1, 128>}]} {
    %c0 = arith.constant 0 : index
    %c0_0 = arith.constant 0 : index
    %0 = vector.load %arg1[%c0, %c0_0] : memref<128x13xf32, #tpu.memory_space<vmem>>, vector<128x13xf32>
    %c0_1 = arith.constant 0 : index
    %c0_2 = arith.constant 0 : index
    %1 = vector.load %arg3[%c0_1, %c0_2] : memref<13x9xf32, #tpu.memory_space<vmem>>, vector<13x9xf32>
    %cst = arith.constant dense<0.000000e+00> : vector<128x9xf32>
    %2 = tpu.matmul %0, %1, %cst {dimension_numbers = #tpu.dot_dimension_numbers<[1], [0], [0], [1], [0, 0, 1, 1], [], []>} : vector<128x13xf32>, vector<13x9xf32>, vector<128x9xf32> -> vector<128x9xf32>
    %c0_3 = arith.constant 0 : index
    %c0_4 = arith.constant 0 : index
    %3 = vector.load %arg2[%c0_3, %c0_4] : memref<128x27xbf16, #tpu.memory_space<vmem>>, vector<128x27xbf16>
    %c0_5 = arith.constant 0 : index
    %c0_6 = arith.constant 0 : index
    %4 = vector.load %arg4[%c0_5, %c0_6] : memref<27x286xbf16, #tpu.memory_space<vmem>>, vector<27x286xbf16>
    %cst_7 = arith.constant dense<0.000000e+00> : vector<128x286xf32>
    %5 = tpu.matmul %3, %4, %cst_7 {dimension_numbers = #tpu.dot_dimension_numbers<[1], [0], [0], [1], [0, 0, 1, 1], [], []>} : vector<128x27xbf16>, vector<27x286xbf16>, vector<128x286xf32> -> vector<128x286xf32>
    %cst_8 = arith.constant 0.000000e+00 : f32
    %6 = vector.broadcast %cst_8 : f32 to vector<128x286xf32>
    %7 = arith.cmpf oeq, %5, %6 : vector<128x286xf32>
    %8 = arith.extui %7 : vector<128x286xi1> to vector<128x286xi32>
    %9 = arith.sitofp %8 : vector<128x286xi32> to vector<128x286xf32>
    %10 = arith.truncf %9 : vector<128x286xf32> to vector<128x286xbf16>
    %c0_9 = arith.constant 0 : index
    %c0_10 = arith.constant 0 : index
    %11 = vector.load %arg5[%c0_9, %c0_10] : memref<286x18xbf16, #tpu.memory_space<vmem>>, vector<286x18xbf16>
    %cst_11 = arith.constant dense<0.000000e+00> : vector<128x18xf32>
    %12 = tpu.matmul %10, %11, %cst_11 {dimension_numbers = #tpu.dot_dimension_numbers<[1], [0], [0], [1], [0, 0, 1, 1], [], []>} : vector<128x286xbf16>, vector<286x18xbf16>, vector<128x18xf32> -> vector<128x18xf32>
    %13 = vector.extract_strided_slice %12 {offsets = [0, 0], sizes = [128, 9], strides = [1, 1]} : vector<128x18xf32> to vector<128x9xf32>
    %14 = arith.addf %2, %13 : vector<128x9xf32>
    %15 = vector.extract_strided_slice %12 {offsets = [0, 9], sizes = [128, 9], strides = [1, 1]} : vector<128x18xf32> to vector<128x9xf32>
    %16 = arith.addf %14, %15 : vector<128x9xf32>
    %17 = tpu.iota {dimensions = array<i32: 1>} : vector<128x9xi32>
    %c8_i32 = arith.constant 8 : i32
    %18 = vector.broadcast %c8_i32 : i32 to vector<128x9xi32>
    %19 = arith.cmpi eq, %17, %18 : vector<128x9xi32>
    %cst_12 = arith.constant 1.000000e+00 : f32
    %20 = vector.broadcast %cst_12 : f32 to vector<128x9xf32>
    %21 = arith.select %19, %20, %16 : vector<128x9xi1>, vector<128x9xf32>
    %22 = arith.mulf %16, %21 : vector<128x9xf32>
    %cst_13 = arith.constant 1.000000e+00 : f32
    %23 = vector.broadcast %cst_13 : f32 to vector<8x9xf32>
    %cst_14 = arith.constant dense<0.000000e+00> : vector<8x128xf32>
    %24 = tpu.matmul %23, %22, %cst_14 {dimension_numbers = #tpu.dot_dimension_numbers<[1], [1], [0], [0], [0, 0, 1, 0], [], []>} : vector<8x9xf32>, vector<128x9xf32>, vector<8x128xf32> -> vector<8x128xf32>
    %25 = vector.extract_strided_slice %24 {offsets = [0, 0], sizes = [1, 128], strides = [1, 1]} : vector<8x128xf32> to vector<1x128xf32>
    %c0_15 = arith.constant 0 : index
    %26 = memref.load %arg6[%c0_15] : memref<1xf32, #tpu.memory_space<smem>>
    %27 = vector.broadcast %26 : f32 to vector<1x128xf32>
    %28 = arith.addf %25, %27 : vector<1x128xf32>
    %29 = arith.negf %28 : vector<1x128xf32>
    %30 = math.exp %29 : vector<1x128xf32>
    %cst_16 = arith.constant 1.000000e+00 : f32
    %31 = vector.broadcast %cst_16 : f32 to vector<1x128xf32>
    %32 = arith.addf %31, %30 : vector<1x128xf32>
    %33 = arith.divf %31, %32 : vector<1x128xf32>
    %c0_17 = arith.constant 0 : index
    %c0_18 = arith.constant 0 : index
    %34 = vector.load %arg7[%c0_17, %c0_18] : memref<1x128xf32, #tpu.memory_space<vmem>>, vector<1x128xf32>
    tpu.vector_store %arg7[%c0_17, %c0_18], %33 {strides = array<i32>} : memref<1x128xf32, #tpu.memory_space<vmem>>, vector<1x128xf32>,
    return
  }
  func.func @transform_0(%arg0: i32) -> (i32, i32) {
    %c0_i32 = arith.constant 0 : i32
    %c0_i32_0 = arith.constant 0 : i32
    return %arg0, %c0_i32 : i32, i32
  }
  func.func @transform_1(%arg0: i32) -> (i32, i32) {
    %c0_i32 = arith.constant 0 : i32
    %c0_i32_0 = arith.constant 0 : i32
    return %arg0, %c0_i32 : i32, i32
  }
  func.func @transform_2(%arg0: i32) -> (i32, i32) {
    %c0_i32 = arith.constant 0 : i32
    %c0_i32_0 = arith.constant 0 : i32
    %c0_i32_1 = arith.constant 0 : i32
    return %c0_i32, %c0_i32_0 : i32, i32
  }
  func.func @transform_3(%arg0: i32) -> (i32, i32) {
    %c0_i32 = arith.constant 0 : i32
    %c0_i32_0 = arith.constant 0 : i32
    %c0_i32_1 = arith.constant 0 : i32
    return %c0_i32, %c0_i32_0 : i32, i32
  }
  func.func @transform_4(%arg0: i32) -> (i32, i32) {
    %c0_i32 = arith.constant 0 : i32
    %c0_i32_0 = arith.constant 0 : i32
    %c0_i32_1 = arith.constant 0 : i32
    return %c0_i32, %c0_i32_0 : i32, i32
  }
  func.func @transform_5(%arg0: i32) -> i32 {
    %c0_i32 = arith.constant 0 : i32
    %c0_i32_0 = arith.constant 0 : i32
    return %c0_i32 : i32
  }
  func.func @transform_6(%arg0: i32) -> (i32, i32) {
    %c0_i32 = arith.constant 0 : i32
    %c0_i32_0 = arith.constant 0 : i32
    return %c0_i32, %arg0 : i32, i32
  }
}

</mosaic_0001>

<llo_original>
// kernel: tpu_custom_call.1
$region0: #{tpu_custom_call.1}
  #allocation0 [shape = 'u32[]', space=smem, size = 0x4, offset = 0x4, fixed_abs, tag = 'smem constant byte address 0x4 - core index']
  #allocation1 [shape = 'u32[144,128]{1,0:T(1,128)}', space=vmem, size = 0x12000, scoped, tag = 'internal scratch']
  #allocation2 [shape = 'f32[1]{0:T(128)S(6)}', space=smem, size = 0x200, scoped, tag = 'scoped memory for tpu_custom_call.1']
  %s0 = inlined_call_operand.vmem [shape: f32[128,13], index: 0, kind: input, shape index: {}]
  %s1 = inlined_call_operand.vmem [shape: bf16[128,27], index: 1, kind: input, shape index: {}]
  %s2 = inlined_call_operand.vmem [shape: f32[13,9], index: 2, kind: input, shape index: {}]
  %s3 = inlined_call_operand.vmem [shape: bf16[27,286], index: 3, kind: input, shape index: {}]
  %s4 = inlined_call_operand.vmem [shape: bf16[286,18], index: 4, kind: input, shape index: {}]
  %s5 = inlined_call_operand.<no memory space> [shape: f32[1], index: 5, kind: input, shape index: {}]
  %s6 = inlined_call_operand.hbm [shape: f32[1,128], index: 6, kind: output, shape index: {}]
  %s7 = sld [smem:[#allocation0]]
  $region34: #{tpu_custom_call.1} parent=0
    _
  %s9 = ssub.s32 1, %s7
  %s10 = scalar_select 0, %s9, %s7
  %11 = sst [smem:[#allocation2]] %s5
  $region1: #{tpu_custom_call.1} parent=0
    #allocation3 [shape = 'u8[512]{0}', space=vmem, size = 0x400, scoped, tag = 'output window, operand 0, single buffered']
    #allocation4 [shape = 's32[1]{0}', space=sflag, size = 0x4, scoped, tag = 'scoped memory for tpu_custom_call.1']
    %12 = vsyncpa [#allocation4], 0
    // Predicated region
    $region2: #{tpu_custom_call.1} parent=1 // pred_check
      _
    $region3: #{tpu_custom_call.1} parent=1 // pred_check_branch
      %14 = sbr.rel (0) target = $region5
    $region4: #{tpu_custom_call.1} parent=1 // pred_region
      _
    $region5: #{tpu_custom_call.1} parent=1 // pred_fallthru
      _
    // Predicated region
    $region6: #{tpu_custom_call.1} parent=1 // pred_check
      _
    $region7: #{tpu_custom_call.1} parent=1 // pred_check_branch
      %16 = sbr.rel (0) target = $region9
    $region8: #{tpu_custom_call.1} parent=1 // pred_region
      _
    $region9: #{tpu_custom_call.1} parent=1 // pred_fallthru
      _
    // Predicated region
    $region10: #{tpu_custom_call.1} parent=1 // pred_check
      _
    $region11: #{tpu_custom_call.1} parent=1 // pred_check_branch
      %18 = sbr.rel (0) target = $region13
    $region12: #{tpu_custom_call.1} parent=1 // pred_region
      _
    $region13: #{tpu_custom_call.1} parent=1 // pred_fallthru
      _
    // Predicated region
    $region14: #{tpu_custom_call.1} parent=1 // pred_check
      _
    $region15: #{tpu_custom_call.1} parent=1 // pred_check_branch
      %20 = sbr.rel (0) target = $region17
    $region16: #{tpu_custom_call.1} parent=1 // pred_region
      _
    $region17: #{tpu_custom_call.1} parent=1 // pred_fallthru
      _
    // Predicated region
    $region18: #{tpu_custom_call.1} parent=1 // pred_check
      _
    $region19: #{tpu_custom_call.1} parent=1 // pred_check_branch
      %22 = sbr.rel (0) target = $region21
    $region20: #{tpu_custom_call.1} parent=1 // pred_region
      _
    $region21: #{tpu_custom_call.1} parent=1 // pred_fallthru
      _
    // Predicated region
    $region22: #{tpu_custom_call.1} parent=1 // pred_check
      _
    $region23: #{tpu_custom_call.1} parent=1 // pred_check_branch
      %24 = sbr.rel (0) target = $region25
    $region24: #{tpu_custom_call.1} parent=1 // pred_region
      _
    $region25: #{tpu_custom_call.1} parent=1 // pred_fallthru
      _
    %v26 = vld [vmem:[%s0] sm:$0xff]
    %v27 = vld [vmem:[%s0 + $0x8] sm:$0xff]
    %v28 = vld [vmem:[%s0 + $0x10] sm:$0xff]
    %v29 = vld [vmem:[%s0 + $0x18] sm:$0xff]
    %v30 = vld [vmem:[%s0 + $0x20] sm:$0xff]
    %v31 = vld [vmem:[%s0 + $0x28] sm:$0xff]
    %v32 = vld [vmem:[%s0 + $0x30] sm:$0xff]
    %v33 = vld [vmem:[%s0 + $0x38] sm:$0xff]
    %v34 = vld [vmem:[%s0 + $0x40] sm:$0xff]
    %v35 = vld [vmem:[%s0 + $0x48] sm:$0xff]
    %v36 = vld [vmem:[%s0 + $0x50] sm:$0xff]
    %v37 = vld [vmem:[%s0 + $0x58] sm:$0xff]
    %v38 = vld [vmem:[%s0 + $0x60] sm:$0xff]
    %v39 = vld [vmem:[%s0 + $0x68] sm:$0xff]
    %v40 = vld [vmem:[%s0 + $0x70] sm:$0xff]
    %v41 = vld [vmem:[%s0 + $0x78] sm:$0xff]
    %v42 = vld [vmem:[%s2] sm:$0xff]
    %v43 = vld [vmem:[%s2 + $0x8] sm:$0x1f]
    %v44 = vld [vmem:[%s1] sm:$0xf]
    %v45 = vld [vmem:[%s1 + $0x4] sm:$0xf]
    %v46 = vld [vmem:[%s1 + $0x8] sm:$0xf]
    %v47 = vld [vmem:[%s1 + $0xc] sm:$0xf]
    %v48 = vld [vmem:[%s1 + $0x10] sm:$0xf]
    %v49 = vld [vmem:[%s1 + $0x14] sm:$0xf]
    %v50 = vld [vmem:[%s1 + $0x18] sm:$0xf]
    %v51 = vld [vmem:[%s1 + $0x1c] sm:$0xf]
    %v52 = vld [vmem:[%s1 + $0x20] sm:$0xf]
    %v53 = vld [vmem:[%s1 + $0x24] sm:$0xf]
    %v54 = vld [vmem:[%s1 + $0x28] sm:$0xf]
    %v55 = vld [vmem:[%s1 + $0x2c] sm:$0xf]
    %v56 = vld [vmem:[%s1 + $0x30] sm:$0xf]
    %v57 = vld [vmem:[%s1 + $0x34] sm:$0xf]
    %v58 = vld [vmem:[%s1 + $0x38] sm:$0xf]
    %v59 = vld [vmem:[%s1 + $0x3c] sm:$0xf]
    %v60 = vld [vmem:[%s3] sm:$0xff]
    %v61 = vld [vmem:[%s3 + $0x8] sm:$0xf]
    %v62 = vld [vmem:[%s3 + $0xc] sm:$0xff]
    %v63 = vld [vmem:[%s3 + $0x14] sm:$0xf]
    %v64 = vld [vmem:[%s3 + $0x18] sm:$0xff]
    %v65 = vld [vmem:[%s3 + $0x20] sm:$0xf]
    %v66 = vld [vmem:[%s3 + $0x24] sm:$0x33]
    %v67 = vld [vmem:[%s3 + $0x2c] sm:$0x3]
    %v84 = vunpack.c.l.b16 %v44
    %v85 = vunpack.c.l.b16 %v45
    %v86 = vunpack.c.l.b16 %v46
    %v87 = vunpack.c.l.b16 %v47
    %v88 = vunpack.c.l.b16 %v48
    %v89 = vunpack.c.l.b16 %v49
    %v90 = vunpack.c.l.b16 %v50
    %v91 = vunpack.c.l.b16 %v51
    %v92 = vunpack.c.l.b16 %v52
    %v93 = vunpack.c.l.b16 %v53
    %v94 = vunpack.c.l.b16 %v54
    %v95 = vunpack.c.l.b16 %v55
    %v96 = vunpack.c.l.b16 %v56
    %v97 = vunpack.c.l.b16 %v57
    %v98 = vunpack.c.l.b16 %v58
    %v99 = vunpack.c.l.b16 %v59
    %v100 = vpack.c.b16 %v85, %v84
    %v101 = vpack.c.b16 %v87, %v86
    %v102 = vpack.c.b16 %v89, %v88
    %v103 = vpack.c.b16 %v91, %v90
    %v104 = vpack.c.b16 %v93, %v92
    %v105 = vpack.c.b16 %v95, %v94
    %v106 = vpack.c.b16 %v97, %v96
    %v107 = vpack.c.b16 %v99, %v98
    %v116 = vunpack.c.l.b16 %v60
    %v117 = vunpack.c.h.b16 %v60
    %v118 = vunpack.c.l.b16 %v61
    %v119 = vunpack.c.l.b16 %v62
    %v120 = vunpack.c.h.b16 %v62
    %v121 = vunpack.c.l.b16 %v63
    %v122 = vunpack.c.l.b16 %v64
    %v123 = vunpack.c.h.b16 %v64
    %v124 = vunpack.c.l.b16 %v65
    %v125 = vunpack.c.l.b16 %v66
    %v126 = vunpack.c.h.b16 %v66
    %v127 = vunpack.c.l.b16 %v67
    %v128 = vpack.c.b16 %v119, %v116
    %v129 = vpack.c.b16 %v120, %v117
    %v130 = vpack.c.b16 %v121, %v118
    %v131 = vpack.c.b16 %v125, %v122
    %v132 = vpack.c.b16 %v126, %v123
    %v133 = vpack.c.b16 %v127, %v124
    %vm137 = vcmask 220160
    %v139 = vsel %vm137, %v100, 0
    %v142 = vsel %vm137, %v101, 0
    %v145 = vsel %vm137, %v102, 0
    %v148 = vsel %vm137, %v103, 0
    %v151 = vsel %vm137, %v104, 0
    %v154 = vsel %vm137, %v105, 0
    %v157 = vsel %vm137, %v106, 0
    %v160 = vsel %vm137, %v107, 0
    %vm162 = vcmask 1044480
    %vm163 = vcmask 1045504
    %v164 = vsel %vm162, 4294967295, 65535
    %v165 = vsel %vm163, %v164, 0
    %v167 = vand.u32 %v131, %v165
    %v170 = vand.u32 %v132, %v165
    %v173 = vand.u32 %v133, %v165
    %175 = vmatprep.subr.bf16.mxu0 %v129
    %176 = vmatpush1.bf16.msra.mxu0 %v128
    %177 = vmatprep.subr.bf16.mxu0 %v170
    %178 = vmatpush1.bf16.msra.mxu0 %v167
    %179 = vmatprep.subr.bf16.mxu0 0
    %180 = vmatpush1.bf16.msra.mxu0 0
    %181 = vmatprep.subr.bf16.mxu0 0
    %182 = vmatpush1.bf16.msra.mxu0 0
    %183 = vmatprep.subr.bf16.mxu0 0
    %184 = vmatpush1.bf16.msra.mxu0 0
    %185 = vmatprep.subr.bf16.mxu0 0
    %186 = vmatpush1.bf16.msra.mxu0 0
    %187 = vmatprep.subr.bf16.mxu0 0
    %188 = vmatpush1.bf16.msra.mxu0 0
    %189 = vmatprep.subr.bf16.mxu0 0
    %190 = vmatpush1.bf16.msra.mxu0 0
    %191 = vmatprep.subr.bf16.mxu0 0
    %192 = vmatpush1.bf16.msra.mxu0 0
    %193 = vmatprep.subr.bf16.mxu0 0
    %194 = vmatpush1.bf16.msra.mxu0 0
    %195 = vmatprep.subr.bf16.mxu0 0
    %196 = vmatpush1.bf16.msra.mxu0 0
    %197 = vmatprep.subr.bf16.mxu0 0
    %198 = vmatpush1.bf16.msra.mxu0 0
    %199 = vmatprep.subr.bf16.mxu0 0
    %200 = vmatpush1.bf16.msra.mxu0 0
    %201 = vmatprep.subr.bf16.mxu0 0
    %202 = vmatpush1.bf16.msra.mxu0 0
    %203 = vmatprep.subr.bf16.mxu0 0
    %204 = vmatpush1.bf16.msra.mxu0 0
    %205 = vmatprep.subr.bf16.mxu0 0
    %206 = vmatpush1.bf16.msra.mxu0 0
    %207 = vmatprep.mubr.bf16.mxu0 0
    %208 = vmatmul.mubr.bf16.gmra.mrb[0].mxu0 %v139
    %v209 = vpop.f32.mrb[0].mxu0
    %v210 = vadd.f32 0.0, %v209
    %v211 = vpop.f32.mrb[0].mxu0
    %v212 = vadd.f32 0.0, %v211
    %v213 = vpop.f32.mrb[0].mxu0
    %v214 = vadd.f32 0.0, %v213
    %v215 = vpop.f32.mrb[0].mxu0
    %v216 = vadd.f32 0.0, %v215
    %217 = vmatprep.mubr.bf16.mxu0 0
    %218 = vmatmul.mubr.bf16.gmra.mrb[0].mxu0 %v142
    %v219 = vpop.f32.mrb[0].mxu0
    %v220 = vadd.f32 0.0, %v219
    %v221 = vpop.f32.mrb[0].mxu0
    %v222 = vadd.f32 0.0, %v221
    %v223 = vpop.f32.mrb[0].mxu0
    %v224 = vadd.f32 0.0, %v223
    %v225 = vpop.f32.mrb[0].mxu0
    %v226 = vadd.f32 0.0, %v225
    %227 = vmatprep.mubr.bf16.mxu0 0
    %228 = vmatmul.mubr.bf16.gmra.mrb[0].mxu0 %v145
    %v229 = vpop.f32.mrb[0].mxu0
    %v230 = vadd.f32 0.0, %v229
    %v231 = vpop.f32.mrb[0].mxu0
    %v232 = vadd.f32 0.0, %v231
    %v233 = vpop.f32.mrb[0].mxu0
    %v234 = vadd.f32 0.0, %v233
    %v235 = vpop.f32.mrb[0].mxu0
    %v236 = vadd.f32 0.0, %v235
    %237 = vmatprep.mubr.bf16.mxu0 0
    %238 = vmatmul.mubr.bf16.gmra.mrb[0].mxu0 %v148
    %v239 = vpop.f32.mrb[0].mxu0
    %v240 = vadd.f32 0.0, %v239
    %v241 = vpop.f32.mrb[0].mxu0
    %v242 = vadd.f32 0.0, %v241
    %v243 = vpop.f32.mrb[0].mxu0
    %v244 = vadd.f32 0.0, %v243
    %v245 = vpop.f32.mrb[0].mxu0
    %v246 = vadd.f32 0.0, %v245
    %247 = vmatprep.mubr.bf16.mxu0 0
    %248 = vmatmul.mubr.bf16.gmra.mrb[0].mxu0 %v151
    %v249 = vpop.f32.mrb[0].mxu0
    %v250 = vadd.f32 0.0, %v249
    %v251 = vpop.f32.mrb[0].mxu0
    %v252 = vadd.f32 0.0, %v251
    %v253 = vpop.f32.mrb[0].mxu0
    %v254 = vadd.f32 0.0, %v253
    %v255 = vpop.f32.mrb[0].mxu0
    %v256 = vadd.f32 0.0, %v255
    %257 = vmatprep.mubr.bf16.mxu0 0
    %258 = vmatmul.mubr.bf16.gmra.mrb[0].mxu0 %v154
    %v259 = vpop.f32.mrb[0].mxu0
    %v260 = vadd.f32 0.0, %v259
    %v261 = vpop.f32.mrb[0].mxu0
    %v262 = vadd.f32 0.0, %v261
    %v263 = vpop.f32.mrb[0].mxu0
    %v264 = vadd.f32 0.0, %v263
    %v265 = vpop.f32.mrb[0].mxu0
    %v266 = vadd.f32 0.0, %v265
    %267 = vmatprep.mubr.bf16.mxu0 0
    %268 = vmatmul.mubr.bf16.gmra.mrb[0].mxu0 %v157
    %v269 = vpop.f32.mrb[0].mxu0
    %v270 = vadd.f32 0.0, %v269
    %v271 = vpop.f32.mrb[0].mxu0
    %v272 = vadd.f32 0.0, %v271
    %v273 = vpop.f32.mrb[0].mxu0
    %v274 = vadd.f32 0.0, %v273
    %v275 = vpop.f32.mrb[0].mxu0
    %v276 = vadd.f32 0.0, %v275
    %277 = vmatprep.mubr.bf16.mxu0 0
    %278 = vmatmul.mubr.bf16.gmra.mrb[0].mxu0 %v160
    %v279 = vpop.f32.mrb[0].mxu0
    %v280 = vadd.f32 0.0, %v279
    %v281 = vpop.f32.mrb[0].mxu0
    %v282 = vadd.f32 0.0, %v281
    %v283 = vpop.f32.mrb[0].mxu0
    %v284 = vadd.f32 0.0, %v283
    %v285 = vpop.f32.mrb[0].mxu0
    %v286 = vadd.f32 0.0, %v285
    %287 = vdwg.mxu0
    %288 = vmatprep.subr.bf16.mxu0 0
    %289 = vmatpush1.bf16.msra.mxu0 %v130
    %290 = vmatprep.subr.bf16.mxu0 0
    %291 = vmatpush1.bf16.msra.mxu0 %v173
    %292 = vmatprep.subr.bf16.mxu0 0
    %293 = vmatpush1.bf16.msra.mxu0 0
    %294 = vmatprep.subr.bf16.mxu0 0
    %295 = vmatpush1.bf16.msra.mxu0 0
    %296 = vmatprep.subr.bf16.mxu0 0
    %297 = vmatpush1.bf16.msra.mxu0 0
    %298 = vmatprep.subr.bf16.mxu0 0
    %299 = vmatpush1.bf16.msra.mxu0 0
    %300 = vmatprep.subr.bf16.mxu0 0
    %301 = vmatpush1.bf16.msra.mxu0 0
    %302 = vmatprep.subr.bf16.mxu0 0
    %303 = vmatpush1.bf16.msra.mxu0 0
    %304 = vmatprep.subr.bf16.mxu0 0
    %305 = vmatpush1.bf16.msra.mxu0 0
    %306 = vmatprep.subr.bf16.mxu0 0
    %307 = vmatpush1.bf16.msra.mxu0 0
    %308 = vmatprep.subr.bf16.mxu0 0
    %309 = vmatpush1.bf16.msra.mxu0 0
    %310 = vmatprep.subr.bf16.mxu0 0
    %311 = vmatpush1.bf16.msra.mxu0 0
    %312 = vmatprep.subr.bf16.mxu0 0
    %313 = vmatpush1.bf16.msra.mxu0 0
    %314 = vmatprep.subr.bf16.mxu0 0
    %315 = vmatpush1.bf16.msra.mxu0 0
    %316 = vmatprep.subr.bf16.mxu0 0
    %317 = vmatpush1.bf16.msra.mxu0 0
    %318 = vmatprep.subr.bf16.mxu0 0
    %319 = vmatpush1.bf16.msra.mxu0 0
    %320 = vmatprep.mubr.bf16.mxu0 0
    %321 = vmatmul.mubr.bf16.gmra.mrb[0].mxu0 %v139
    %v322 = vpop.f32.mrb[0].mxu0
    %v323 = vadd.f32 0.0, %v322
    %v324 = vpop.f32.mrb[0].mxu0
    %v325 = vpop.f32.mrb[0].mxu0
    %v326 = vadd.f32 0.0, %v325
    %v327 = vpop.f32.mrb[0].mxu0
    %328 = vmatprep.mubr.bf16.mxu0 0
    %329 = vmatmul.mubr.bf16.gmra.mrb[0].mxu0 %v142
    %v330 = vpop.f32.mrb[0].mxu0
    %v331 = vadd.f32 0.0, %v330
    %v332 = vpop.f32.mrb[0].mxu0
    %v333 = vpop.f32.mrb[0].mxu0
    %v334 = vadd.f32 0.0, %v333
    %v335 = vpop.f32.mrb[0].mxu0
    %336 = vmatprep.mubr.bf16.mxu0 0
    %337 = vmatmul.mubr.bf16.gmra.mrb[0].mxu0 %v145
    %v338 = vpop.f32.mrb[0].mxu0
    %v339 = vadd.f32 0.0, %v338
    %v340 = vpop.f32.mrb[0].mxu0
    %v341 = vpop.f32.mrb[0].mxu0
    %v342 = vadd.f32 0.0, %v341
    %v343 = vpop.f32.mrb[0].mxu0
    %344 = vmatprep.mubr.bf16.mxu0 0
    %345 = vmatmul.mubr.bf16.gmra.mrb[0].mxu0 %v148
    %v346 = vpop.f32.mrb[0].mxu0
    %v347 = vadd.f32 0.0, %v346
    %v348 = vpop.f32.mrb[0].mxu0
    %v349 = vpop.f32.mrb[0].mxu0
    %v350 = vadd.f32 0.0, %v349
    %v351 = vpop.f32.mrb[0].mxu0
    %352 = vmatprep.mubr.bf16.mxu0 0
    %353 = vmatmul.mubr.bf16.gmra.mrb[0].mxu0 %v151
    %v354 = vpop.f32.mrb[0].mxu0
    %v355 = vadd.f32 0.0, %v354
    %v356 = vpop.f32.mrb[0].mxu0
    %v357 = vpop.f32.mrb[0].mxu0
    %v358 = vadd.f32 0.0, %v357
    %v359 = vpop.f32.mrb[0].mxu0
    %360 = vmatprep.mubr.bf16.mxu0 0
    %361 = vmatmul.mubr.bf16.gmra.mrb[0].mxu0 %v154
    %v362 = vpop.f32.mrb[0].mxu0
    %v363 = vadd.f32 0.0, %v362
    %v364 = vpop.f32.mrb[0].mxu0
    %v365 = vpop.f32.mrb[0].mxu0
    %v366 = vadd.f32 0.0, %v365
    %v367 = vpop.f32.mrb[0].mxu0
    %368 = vmatprep.mubr.bf16.mxu0 0
    %369 = vmatmul.mubr.bf16.gmra.mrb[0].mxu0 %v157
    %v370 = vpop.f32.mrb[0].mxu0
    %v371 = vadd.f32 0.0, %v370
    %v372 = vpop.f32.mrb[0].mxu0
    %v373 = vpop.f32.mrb[0].mxu0
    %v374 = vadd.f32 0.0, %v373
    %v375 = vpop.f32.mrb[0].mxu0
    %376 = vmatprep.mubr.bf16.mxu0 0
    %377 = vmatmul.mubr.bf16.gmra.mrb[0].mxu0 %v160
    %v378 = vpop.f32.mrb[0].mxu0
    %v379 = vadd.f32 0.0, %v378
    %v380 = vpop.f32.mrb[0].mxu0
    %v381 = vpop.f32.mrb[0].mxu0
    %v382 = vadd.f32 0.0, %v381
    %v383 = vpop.f32.mrb[0].mxu0
    %384 = vdwg.mxu0
    %vm385 = vcmp.eq.f32.partialorder %v210, 0.0
    %vm386 = vcmp.eq.f32.partialorder %v212, 0.0
    %vm387 = vcmp.eq.f32.partialorder %v323, 0.0
    %vm388 = vcmp.eq.f32.partialorder %v214, 0.0
    %vm389 = vcmp.eq.f32.partialorder %v216, 0.0
    %vm390 = vcmp.eq.f32.partialorder %v326, 0.0
    %vm391 = vcmp.eq.f32.partialorder %v220, 0.0
    %vm392 = vcmp.eq.f32.partialorder %v222, 0.0
    %vm393 = vcmp.eq.f32.partialorder %v331, 0.0
    %vm394 = vcmp.eq.f32.partialorder %v224, 0.0
    %vm395 = vcmp.eq.f32.partialorder %v226, 0.0
    %vm396 = vcmp.eq.f32.partialorder %v334, 0.0
    %vm397 = vcmp.eq.f32.partialorder %v230, 0.0
    %vm398 = vcmp.eq.f32.partialorder %v232, 0.0
    %vm399 = vcmp.eq.f32.partialorder %v339, 0.0
    %vm400 = vcmp.eq.f32.partialorder %v234, 0.0
    %vm401 = vcmp.eq.f32.partialorder %v236, 0.0
    %vm402 = vcmp.eq.f32.partialorder %v342, 0.0
    %vm403 = vcmp.eq.f32.partialorder %v240, 0.0
    %vm404 = vcmp.eq.f32.partialorder %v242, 0.0
    %vm405 = vcmp.eq.f32.partialorder %v347, 0.0
    %vm406 = vcmp.eq.f32.partialorder %v244, 0.0
    %vm407 = vcmp.eq.f32.partialorder %v246, 0.0
    %vm408 = vcmp.eq.f32.partialorder %v350, 0.0
    %vm409 = vcmp.eq.f32.partialorder %v250, 0.0
    %vm410 = vcmp.eq.f32.partialorder %v252, 0.0
    %vm411 = vcmp.eq.f32.partialorder %v355, 0.0
    %vm412 = vcmp.eq.f32.partialorder %v254, 0.0
    %vm413 = vcmp.eq.f32.partialorder %v256, 0.0
    %vm414 = vcmp.eq.f32.partialorder %v358, 0.0
    %vm415 = vcmp.eq.f32.partialorder %v260, 0.0
    %vm416 = vcmp.eq.f32.partialorder %v262, 0.0
    %vm417 = vcmp.eq.f32.partialorder %v363, 0.0
    %vm418 = vcmp.eq.f32.partialorder %v264, 0.0
    %vm419 = vcmp.eq.f32.partialorder %v266, 0.0
    %vm420 = vcmp.eq.f32.partialorder %v366, 0.0
    %vm421 = vcmp.eq.f32.partialorder %v270, 0.0
    %vm422 = vcmp.eq.f32.partialorder %v272, 0.0
    %vm423 = vcmp.eq.f32.partialorder %v371, 0.0
    %vm424 = vcmp.eq.f32.partialorder %v274, 0.0
    %vm425 = vcmp.eq.f32.partialorder %v276, 0.0
    %vm426 = vcmp.eq.f32.partialorder %v374, 0.0
    %vm427 = vcmp.eq.f32.partialorder %v280, 0.0
    %vm428 = vcmp.eq.f32.partialorder %v282, 0.0
    %vm429 = vcmp.eq.f32.partialorder %v379, 0.0
    %vm430 = vcmp.eq.f32.partialorder %v284, 0.0
    %vm431 = vcmp.eq.f32.partialorder %v286, 0.0
    %vm432 = vcmp.eq.f32.partialorder %v382, 0.0
    %v433 = vsel %vm385, 1, 0
    %v434 = vsel %vm386, 1, 0
    %v435 = vsel %vm387, 1, 0
    %v436 = vsel %vm388, 1, 0
    %v437 = vsel %vm389, 1, 0
    %v438 = vsel %vm390, 1, 0
    %v439 = vsel %vm391, 1, 0
    %v440 = vsel %vm392, 1, 0
    %v441 = vsel %vm393, 1, 0
    %v442 = vsel %vm394, 1, 0
    %v443 = vsel %vm395, 1, 0
    %v444 = vsel %vm396, 1, 0
    %v445 = vsel %vm397, 1, 0
    %v446 = vsel %vm398, 1, 0
    %v447 = vsel %vm399, 1, 0
    %v448 = vsel %vm400, 1, 0
    %v449 = vsel %vm401, 1, 0
    %v450 = vsel %vm402, 1, 0
    %v451 = vsel %vm403, 1, 0
    %v452 = vsel %vm404, 1, 0
    %v453 = vsel %vm405, 1, 0
    %v454 = vsel %vm406, 1, 0
    %v455 = vsel %vm407, 1, 0
    %v456 = vsel %vm408, 1, 0
    %v457 = vsel %vm409, 1, 0
    %v458 = vsel %vm410, 1, 0
    %v459 = vsel %vm411, 1, 0
    %v460 = vsel %vm412, 1, 0
    %v461 = vsel %vm413, 1, 0
    %v462 = vsel %vm414, 1, 0
    %v463 = vsel %vm415, 1, 0
    %v464 = vsel %vm416, 1, 0
    %v465 = vsel %vm417, 1, 0
    %v466 = vsel %vm418, 1, 0
    %v467 = vsel %vm419, 1, 0
    %v468 = vsel %vm420, 1, 0
    %v469 = vsel %vm421, 1, 0
    %v470 = vsel %vm422, 1, 0
    %v471 = vsel %vm423, 1, 0
    %v472 = vsel %vm424, 1, 0
    %v473 = vsel %vm425, 1, 0
    %v474 = vsel %vm426, 1, 0
    %v475 = vsel %vm427, 1, 0
    %v476 = vsel %vm428, 1, 0
    %v477 = vsel %vm429, 1, 0
    %v478 = vsel %vm430, 1, 0
    %v479 = vsel %vm431, 1, 0
    %v480 = vsel %vm432, 1, 0
    %v481 = vcvt.s32.f32 %v433
    %v482 = vcvt.s32.f32 %v434
    %v483 = vcvt.s32.f32 %v435
    %v484 = vcvt.s32.f32 %v436
    %v485 = vcvt.s32.f32 %v437
    %v486 = vcvt.s32.f32 %v438
    %v487 = vcvt.s32.f32 %v439
    %v488 = vcvt.s32.f32 %v440
    %v489 = vcvt.s32.f32 %v441
    %v490 = vcvt.s32.f32 %v442
    %v491 = vcvt.s32.f32 %v443
    %v492 = vcvt.s32.f32 %v444
    %v493 = vcvt.s32.f32 %v445
    %v494 = vcvt.s32.f32 %v446
    %v495 = vcvt.s32.f32 %v447
    %v496 = vcvt.s32.f32 %v448
    %v497 = vcvt.s32.f32 %v449
    %v498 = vcvt.s32.f32 %v450
    %v499 = vcvt.s32.f32 %v451
    %v500 = vcvt.s32.f32 %v452
    %v501 = vcvt.s32.f32 %v453
    %v502 = vcvt.s32.f32 %v454
    %v503 = vcvt.s32.f32 %v455
    %v504 = vcvt.s32.f32 %v456
    %v505 = vcvt.s32.f32 %v457
    %v506 = vcvt.s32.f32 %v458
    %v507 = vcvt.s32.f32 %v459
    %v508 = vcvt.s32.f32 %v460
    %v509 = vcvt.s32.f32 %v461
    %v510 = vcvt.s32.f32 %v462
    %v511 = vcvt.s32.f32 %v463
    %v512 = vcvt.s32.f32 %v464
    %v513 = vcvt.s32.f32 %v465
    %v514 = vcvt.s32.f32 %v466
    %v515 = vcvt.s32.f32 %v467
    %v516 = vcvt.s32.f32 %v468
    %v517 = vcvt.s32.f32 %v469
    %v518 = vcvt.s32.f32 %v470
    %v519 = vcvt.s32.f32 %v471
    %v520 = vcvt.s32.f32 %v472
    %v521 = vcvt.s32.f32 %v473
    %v522 = vcvt.s32.f32 %v474
    %v523 = vcvt.s32.f32 %v475
    %v524 = vcvt.s32.f32 %v476
    %v525 = vcvt.s32.f32 %v477
    %v526 = vcvt.s32.f32 %v478
    %v527 = vcvt.s32.f32 %v479
    %v528 = vcvt.s32.f32 %v480
    %v529 = vpack.c.bf16 %v484, %v481
    %v530 = vpack.c.bf16 %v485, %v482
    %v531 = vpack.c.bf16 %v486, %v483
    %v532 = vpack.c.bf16 %v490, %v487
    %v533 = vpack.c.bf16 %v491, %v488
    %v534 = vpack.c.bf16 %v492, %v489
    %v535 = vpack.c.bf16 %v496, %v493
    %v536 = vpack.c.bf16 %v497, %v494
    %v537 = vpack.c.bf16 %v498, %v495
    %v538 = vpack.c.bf16 %v502, %v499
    %v539 = vpack.c.bf16 %v503, %v500
    %v540 = vpack.c.bf16 %v504, %v501
    %v541 = vpack.c.bf16 %v508, %v505
    %v542 = vpack.c.bf16 %v509, %v506
    %v543 = vpack.c.bf16 %v510, %v507
    %v544 = vpack.c.bf16 %v514, %v511
    %v545 = vpack.c.bf16 %v515, %v512
    %v546 = vpack.c.bf16 %v516, %v513
    %v547 = vpack.c.bf16 %v520, %v517
    %v548 = vpack.c.bf16 %v521, %v518
    %v549 = vpack.c.bf16 %v522, %v519
    %v550 = vpack.c.bf16 %v526, %v523
    %v551 = vpack.c.bf16 %v527, %v524
    %v552 = vpack.c.bf16 %v528, %v525
    %v553 = vld [vmem:[%s4] sm:$0xf]
    %v554 = vld [vmem:[%s4 + $0x4] sm:$0xf]
    %v555 = vld [vmem:[%s4 + $0x8] sm:$0xf]
    %v556 = vld [vmem:[%s4 + $0xc] sm:$0xf]
    %v557 = vld [vmem:[%s4 + $0x10] sm:$0xf]
    %v558 = vld [vmem:[%s4 + $0x14] sm:$0xf]
    %v559 = vld [vmem:[%s4 + $0x18] sm:$0xf]
    %v560 = vld [vmem:[%s4 + $0x1c] sm:$0xf]
    %v561 = vld [vmem:[%s4 + $0x20] sm:$0xf]
    %v562 = vld [vmem:[%s4 + $0x24] sm:$0xf]
    %v563 = vld [vmem:[%s4 + $0x28] sm:$0xf]
    %v564 = vld [vmem:[%s4 + $0x2c] sm:$0xf]
    %v565 = vld [vmem:[%s4 + $0x30] sm:$0xf]
    %v566 = vld [vmem:[%s4 + $0x34] sm:$0xf]
    %v567 = vld [vmem:[%s4 + $0x38] sm:$0xf]
    %v568 = vld [vmem:[%s4 + $0x3c] sm:$0xf]
    %v569 = vld [vmem:[%s4 + $0x40] sm:$0xf]
    %v570 = vld [vmem:[%s4 + $0x44] sm:$0xf]
    %v571 = vld [vmem:[%s4 + $0x48] sm:$0xf]
    %v572 = vld [vmem:[%s4 + $0x4c] sm:$0xf]
    %v573 = vld [vmem:[%s4 + $0x50] sm:$0xf]
    %v574 = vld [vmem:[%s4 + $0x54] sm:$0xf]
    %v575 = vld [vmem:[%s4 + $0x58] sm:$0xf]
    %v576 = vld [vmem:[%s4 + $0x5c] sm:$0xf]
    %v577 = vld [vmem:[%s4 + $0x60] sm:$0xf]
    %v578 = vld [vmem:[%s4 + $0x64] sm:$0xf]
    %v579 = vld [vmem:[%s4 + $0x68] sm:$0xf]
    %v580 = vld [vmem:[%s4 + $0x6c] sm:$0xf]
    %v581 = vld [vmem:[%s4 + $0x70] sm:$0xf]
    %v582 = vld [vmem:[%s4 + $0x74] sm:$0xf]
    %v583 = vld [vmem:[%s4 + $0x78] sm:$0xf]
    %v584 = vld [vmem:[%s4 + $0x7c] sm:$0xf]
    %v585 = vld [vmem:[%s4 + $0x80] sm:$0xf]
    %v586 = vld [vmem:[%s4 + $0x84] sm:$0xf]
    %v587 = vld [vmem:[%s4 + $0x88] sm:$0xf]
    %v588 = vld [vmem:[%s4 + $0x8c] sm:$0x7]
    %v625 = vunpack.c.l.b16 %v553
    %v626 = vunpack.c.l.b16 %v554
    %v627 = vunpack.c.l.b16 %v555
    %v628 = vunpack.c.l.b16 %v556
    %v629 = vunpack.c.l.b16 %v557
    %v630 = vunpack.c.l.b16 %v558
    %v631 = vunpack.c.l.b16 %v559
    %v632 = vunpack.c.l.b16 %v560
    %v633 = vunpack.c.l.b16 %v561
    %v634 = vunpack.c.l.b16 %v562
    %v635 = vunpack.c.l.b16 %v563
    %v636 = vunpack.c.l.b16 %v564
    %v637 = vunpack.c.l.b16 %v565
    %v638 = vunpack.c.l.b16 %v566
    %v639 = vunpack.c.l.b16 %v567
    %v640 = vunpack.c.l.b16 %v568
    %v641 = vunpack.c.l.b16 %v569
    %v642 = vunpack.c.l.b16 %v570
    %v643 = vunpack.c.l.b16 %v571
    %v644 = vunpack.c.l.b16 %v572
    %v645 = vunpack.c.l.b16 %v573
    %v646 = vunpack.c.l.b16 %v574
    %v647 = vunpack.c.l.b16 %v575
    %v648 = vunpack.c.l.b16 %v576
    %v649 = vunpack.c.l.b16 %v577
    %v650 = vunpack.c.l.b16 %v578
    %v651 = vunpack.c.l.b16 %v579
    %v652 = vunpack.c.l.b16 %v580
    %v653 = vunpack.c.l.b16 %v581
    %v654 = vunpack.c.l.b16 %v582
    %v655 = vunpack.c.l.b16 %v583
    %v656 = vunpack.c.l.b16 %v584
    %v657 = vunpack.c.l.b16 %v585
    %v658 = vunpack.c.l.b16 %v586
    %v659 = vunpack.c.l.b16 %v587
    %v660 = vunpack.c.l.b16 %v588
    %v661 = vpack.c.b16 %v626, %v625
    %v662 = vpack.c.b16 %v628, %v627
    %v663 = vpack.c.b16 %v630, %v629
    %v664 = vpack.c.b16 %v632, %v631
    %v665 = vpack.c.b16 %v634, %v633
    %v666 = vpack.c.b16 %v636, %v635
    %v667 = vpack.c.b16 %v638, %v637
    %v668 = vpack.c.b16 %v640, %v639
    %v669 = vpack.c.b16 %v642, %v641
    %v670 = vpack.c.b16 %v644, %v643
    %v671 = vpack.c.b16 %v646, %v645
    %v672 = vpack.c.b16 %v648, %v647
    %v673 = vpack.c.b16 %v650, %v649
    %v674 = vpack.c.b16 %v652, %v651
    %v675 = vpack.c.b16 %v654, %v653
    %v676 = vpack.c.b16 %v656, %v655
    %v677 = vpack.c.b16 %v658, %v657
    %v678 = vpack.c.b16 %v660, %v659
    %vm696 = vcmask 244736
    %v698 = vsel %vm696, %v531, 0
    %v701 = vsel %vm696, %v534, 0
    %v704 = vsel %vm696, %v537, 0
    %v707 = vsel %vm696, %v540, 0
    %v710 = vsel %vm696, %v543, 0
    %v713 = vsel %vm696, %v546, 0
    %v716 = vsel %vm696, %v549, 0
    %v719 = vsel %vm696, %v552, 0
    %vm721 = vcmask 1046528
    %v723 = vsel %vm721, %v678, 0
    %725 = vmatprep.subr.bf16.mxu0 0
    %726 = vmatpush1.bf16.msra.mxu0 %v661
    %727 = vmatprep.subr.bf16.mxu0 0
    %728 = vmatpush1.bf16.msra.mxu0 %v662
    %729 = vmatprep.subr.bf16.mxu0 0
    %730 = vmatpush1.bf16.msra.mxu0 %v663
    %731 = vmatprep.subr.bf16.mxu0 0
    %732 = vmatpush1.bf16.msra.mxu0 %v664
    %733 = vmatprep.subr.bf16.mxu0 0
    %734 = vmatpush1.bf16.msra.mxu0 %v665
    %735 = vmatprep.subr.bf16.mxu0 0
    %736 = vmatpush1.bf16.msra.mxu0 %v666
    %737 = vmatprep.subr.bf16.mxu0 0
    %738 = vmatpush1.bf16.msra.mxu0 %v667
    %739 = vmatprep.subr.bf16.mxu0 0
    %740 = vmatpush1.bf16.msra.mxu0 %v668
    %741 = vmatprep.subr.bf16.mxu0 0
    %742 = vmatpush1.bf16.msra.mxu0 %v669
    %743 = vmatprep.subr.bf16.mxu0 0
    %744 = vmatpush1.bf16.msra.mxu0 %v670
    %745 = vmatprep.subr.bf16.mxu0 0
    %746 = vmatpush1.bf16.msra.mxu0 %v671
    %747 = vmatprep.subr.bf16.mxu0 0
    %748 = vmatpush1.bf16.msra.mxu0 %v672
    %749 = vmatprep.subr.bf16.mxu0 0
    %750 = vmatpush1.bf16.msra.mxu0 %v673
    %751 = vmatprep.subr.bf16.mxu0 0
    %752 = vmatpush1.bf16.msra.mxu0 %v674
    %753 = vmatprep.subr.bf16.mxu0 0
    %754 = vmatpush1.bf16.msra.mxu0 %v675
    %755 = vmatprep.subr.bf16.mxu0 0
    %756 = vmatpush1.bf16.msra.mxu0 %v676
    %757 = vmatprep.mubr.bf16.mxu0 %v530
    %758 = vmatmul.mubr.bf16.gmra.mrb[0].mxu0 %v529
    %v759 = vpop.f32.mrb[0].mxu0
    %v760 = vadd.f32 0.0, %v759
    %v761 = vpop.f32.mrb[0].mxu0
    %v762 = vpop.f32.mrb[0].mxu0
    %v763 = vadd.f32 0.0, %v762
    %v764 = vpop.f32.mrb[0].mxu0
    %765 = vmatprep.mubr.bf16.mxu0 %v533
    %766 = vmatmul.mubr.bf16.gmra.mrb[0].mxu0 %v532
    %v767 = vpop.f32.mrb[0].mxu0
    %v768 = vadd.f32 0.0, %v767
    %v769 = vpop.f32.mrb[0].mxu0
    %v770 = vpop.f32.mrb[0].mxu0
    %v771 = vadd.f32 0.0, %v770
    %v772 = vpop.f32.mrb[0].mxu0
    %773 = vmatprep.mubr.bf16.mxu0 %v536
    %774 = vmatmul.mubr.bf16.gmra.mrb[0].mxu0 %v535
    %v775 = vpop.f32.mrb[0].mxu0
    %v776 = vadd.f32 0.0, %v775
    %v777 = vpop.f32.mrb[0].mxu0
    %v778 = vpop.f32.mrb[0].mxu0
    %v779 = vadd.f32 0.0, %v778
    %v780 = vpop.f32.mrb[0].mxu0
    %781 = vmatprep.mubr.bf16.mxu0 %v539
    %782 = vmatmul.mubr.bf16.gmra.mrb[0].mxu0 %v538
    %v783 = vpop.f32.mrb[0].mxu0
    %v784 = vadd.f32 0.0, %v783
    %v785 = vpop.f32.mrb[0].mxu0
    %v786 = vpop.f32.mrb[0].mxu0
    %v787 = vadd.f32 0.0, %v786
    %v788 = vpop.f32.mrb[0].mxu0
    %789 = vmatprep.mubr.bf16.mxu0 %v542
    %790 = vmatmul.mubr.bf16.gmra.mrb[0].mxu0 %v541
    %v791 = vpop.f32.mrb[0].mxu0
    %v792 = vadd.f32 0.0, %v791
    %v793 = vpop.f32.mrb[0].mxu0
    %v794 = vpop.f32.mrb[0].mxu0
    %v795 = vadd.f32 0.0, %v794
    %v796 = vpop.f32.mrb[0].mxu0
    %797 = vmatprep.mubr.bf16.mxu0 %v545
    %798 = vmatmul.mubr.bf16.gmra.mrb[0].mxu0 %v544
    %v799 = vpop.f32.mrb[0].mxu0
    %v800 = vadd.f32 0.0, %v799
    %v801 = vpop.f32.mrb[0].mxu0
    %v802 = vpop.f32.mrb[0].mxu0
    %v803 = vadd.f32 0.0, %v802
    %v804 = vpop.f32.mrb[0].mxu0
    %805 = vmatprep.mubr.bf16.mxu0 %v548
    %806 = vmatmul.mubr.bf16.gmra.mrb[0].mxu0 %v547
    %v807 = vpop.f32.mrb[0].mxu0
    %v808 = vadd.f32 0.0, %v807
    %v809 = vpop.f32.mrb[0].mxu0
    %v810 = vpop.f32.mrb[0].mxu0
    %v811 = vadd.f32 0.0, %v810
    %v812 = vpop.f32.mrb[0].mxu0
    %813 = vmatprep.mubr.bf16.mxu0 %v551
    %814 = vmatmul.mubr.bf16.gmra.mrb[0].mxu0 %v550
    %v815 = vpop.f32.mrb[0].mxu0
    %v816 = vadd.f32 0.0, %v815
    %v817 = vpop.f32.mrb[0].mxu0
    %v818 = vpop.f32.mrb[0].mxu0
    %v819 = vadd.f32 0.0, %v818
    %v820 = vpop.f32.mrb[0].mxu0
    %821 = vdwg.mxu0
    %822 = vmatprep.subr.bf16.mxu0 0
    %823 = vmatpush1.bf16.msra.mxu0 %v677
    %824 = vmatprep.subr.bf16.mxu0 0
    %825 = vmatpush1.bf16.msra.mxu0 %v723
    %826 = vmatprep.subr.bf16.mxu0 0
    %827 = vmatpush1.bf16.msra.mxu0 0
    %828 = vmatprep.subr.bf16.mxu0 0
    %829 = vmatpush1.bf16.msra.mxu0 0
    %830 = vmatprep.subr.bf16.mxu0 0
    %831 = vmatpush1.bf16.msra.mxu0 0
    %832 = vmatprep.subr.bf16.mxu0 0
    %833 = vmatpush1.bf16.msra.mxu0 0
    %834 = vmatprep.subr.bf16.mxu0 0
    %835 = vmatpush1.bf16.msra.mxu0 0
    %836 = vmatprep.subr.bf16.mxu0 0
    %837 = vmatpush1.bf16.msra.mxu0 0
    %838 = vmatprep.subr.bf16.mxu0 0
    %839 = vmatpush1.bf16.msra.mxu0 0
    %840 = vmatprep.subr.bf16.mxu0 0
    %841 = vmatpush1.bf16.msra.mxu0 0
    %842 = vmatprep.subr.bf16.mxu0 0
    %843 = vmatpush1.bf16.msra.mxu0 0
    %844 = vmatprep.subr.bf16.mxu0 0
    %845 = vmatpush1.bf16.msra.mxu0 0
    %846 = vmatprep.subr.bf16.mxu0 0
    %847 = vmatpush1.bf16.msra.mxu0 0
    %848 = vmatprep.subr.bf16.mxu0 0
    %849 = vmatpush1.bf16.msra.mxu0 0
    %850 = vmatprep.subr.bf16.mxu0 0
    %851 = vmatpush1.bf16.msra.mxu0 0
    %852 = vmatprep.subr.bf16.mxu0 0
    %853 = vmatpush1.bf16.msra.mxu0 0
    %854 = vmatprep.mubr.bf16.mxu0 0
    %855 = vmatmul.mubr.bf16.gmra.mrb[0].mxu0 %v698
    %v856 = vpop.f32.mrb[0].mxu0
    %v857 = vadd.f32 %v760, %v856
    %v858 = vpop.f32.mrb[0].mxu0
    %v859 = vpop.f32.mrb[0].mxu0
    %v860 = vadd.f32 %v763, %v859
    %v861 = vpop.f32.mrb[0].mxu0
    %862 = vmatprep.mubr.bf16.mxu0 0
    %863 = vmatmul.mubr.bf16.gmra.mrb[0].mxu0 %v701
    %v864 = vpop.f32.mrb[0].mxu0
    %v865 = vadd.f32 %v768, %v864
    %v866 = vpop.f32.mrb[0].mxu0
    %v867 = vpop.f32.mrb[0].mxu0
    %v868 = vadd.f32 %v771, %v867
    %v869 = vpop.f32.mrb[0].mxu0
    %870 = vmatprep.mubr.bf16.mxu0 0
    %871 = vmatmul.mubr.bf16.gmra.mrb[0].mxu0 %v704
    %v872 = vpop.f32.mrb[0].mxu0
    %v873 = vadd.f32 %v776, %v872
    %v874 = vpop.f32.mrb[0].mxu0
    %v875 = vpop.f32.mrb[0].mxu0
    %v876 = vadd.f32 %v779, %v875
    %v877 = vpop.f32.mrb[0].mxu0
    %878 = vmatprep.mubr.bf16.mxu0 0
    %879 = vmatmul.mubr.bf16.gmra.mrb[0].mxu0 %v707
    %v880 = vpop.f32.mrb[0].mxu0
    %v881 = vadd.f32 %v784, %v880
    %v882 = vpop.f32.mrb[0].mxu0
    %v883 = vpop.f32.mrb[0].mxu0
    %v884 = vadd.f32 %v787, %v883
    %v885 = vpop.f32.mrb[0].mxu0
    %886 = vmatprep.mubr.bf16.mxu0 0
    %887 = vmatmul.mubr.bf16.gmra.mrb[0].mxu0 %v710
    %v888 = vpop.f32.mrb[0].mxu0
    %v889 = vadd.f32 %v792, %v888
    %v890 = vpop.f32.mrb[0].mxu0
    %v891 = vpop.f32.mrb[0].mxu0
    %v892 = vadd.f32 %v795, %v891
    %v893 = vpop.f32.mrb[0].mxu0
    %894 = vmatprep.mubr.bf16.mxu0 0
    %895 = vmatmul.mubr.bf16.gmra.mrb[0].mxu0 %v713
    %v896 = vpop.f32.mrb[0].mxu0
    %v897 = vadd.f32 %v800, %v896
    %v898 = vpop.f32.mrb[0].mxu0
    %v899 = vpop.f32.mrb[0].mxu0
    %v900 = vadd.f32 %v803, %v899
    %v901 = vpop.f32.mrb[0].mxu0
    %902 = vmatprep.mubr.bf16.mxu0 0
    %903 = vmatmul.mubr.bf16.gmra.mrb[0].mxu0 %v716
    %v904 = vpop.f32.mrb[0].mxu0
    %v905 = vadd.f32 %v808, %v904
    %v906 = vpop.f32.mrb[0].mxu0
    %v907 = vpop.f32.mrb[0].mxu0
    %v908 = vadd.f32 %v811, %v907
    %v909 = vpop.f32.mrb[0].mxu0
    %910 = vmatprep.mubr.bf16.mxu0 0
    %911 = vmatmul.mubr.bf16.gmra.mrb[0].mxu0 %v719
    %v912 = vpop.f32.mrb[0].mxu0
    %v913 = vadd.f32 %v816, %v912
    %v914 = vpop.f32.mrb[0].mxu0
    %v915 = vpop.f32.mrb[0].mxu0
    %v916 = vadd.f32 %v819, %v915
    %v917 = vpop.f32.mrb[0].mxu0
    %918 = vdwg.mxu0
    %vm919 = vcmask 105472
    %v921 = vsel %vm919, %v26, 0
    %v924 = vsel %vm919, %v27, 0
    %v927 = vsel %vm919, %v28, 0
    %v930 = vsel %vm919, %v29, 0
    %v933 = vsel %vm919, %v30, 0
    %v936 = vsel %vm919, %v31, 0
    %v939 = vsel %vm919, %v32, 0
    %v942 = vsel %vm919, %v33, 0
    %v945 = vsel %vm919, %v34, 0
    %v948 = vsel %vm919, %v35, 0
    %v951 = vsel %vm919, %v36, 0
    %v954 = vsel %vm919, %v37, 0
    %v957 = vsel %vm919, %v38, 0
    %v960 = vsel %vm919, %v39, 0
    %v963 = vsel %vm919, %v40, 0
    %v966 = vsel %vm919, %v41, 0
    %v969 = vsel %vm162, %v43, 0
    %971 = vmatprep.subr.mxu0 0.0
    %972 = vmatpush1.msra.mxu0 %v42
    %973 = vmatprep.subr.mxu0 0.0
    %974 = vmatpush1.msra.mxu0 %v969
    %975 = vmatprep.subr.mxu0 0.0
    %976 = vmatpush1.msra.mxu0 0.0
    %977 = vmatprep.subr.mxu0 0.0
    %978 = vmatpush1.msra.mxu0 0.0
    %979 = vmatprep.subr.mxu0 0.0
    %980 = vmatpush1.msra.mxu0 0.0
    %981 = vmatprep.subr.mxu0 0.0
    %982 = vmatpush1.msra.mxu0 0.0
    %983 = vmatprep.subr.mxu0 0.0
    %984 = vmatpush1.msra.mxu0 0.0
    %985 = vmatprep.subr.mxu0 0.0
    %986 = vmatpush1.msra.mxu0 0.0
    %987 = vmatprep.subr.mxu0 0.0
    %988 = vmatpush1.msra.mxu0 0.0
    %989 = vmatprep.subr.mxu0 0.0
    %990 = vmatpush1.msra.mxu0 0.0
    %991 = vmatprep.subr.mxu0 0.0
    %992 = vmatpush1.msra.mxu0 0.0
    %993 = vmatprep.subr.mxu0 0.0
    %994 = vmatpush1.msra.mxu0 0.0
    %995 = vmatprep.subr.mxu0 0.0
    %996 = vmatpush1.msra.mxu0 0.0
    %997 = vmatprep.subr.mxu0 0.0
    %998 = vmatpush1.msra.mxu0 0.0
    %999 = vmatprep.subr.mxu0 0.0
    %1000 = vmatpush1.msra.mxu0 0.0
    %1001 = vmatprep.subr.mxu0 0.0
    %1002 = vmatpush1.msra.mxu0 0.0
    %1003 = vmatprep.subr.mxu0 0.0
    %1004 = vmatpush1.msra.mxu0 0.0
    %1005 = vmatprep.subr.mxu0 0.0
    %1006 = vmatpush1.msra.mxu0 0.0
    %1007 = vmatprep.subr.mxu0 0.0
    %1008 = vmatpush1.msra.mxu0 0.0
    %1009 = vmatprep.subr.mxu0 0.0
    %1010 = vmatpush1.msra.mxu0 0.0
    %1011 = vmatprep.subr.mxu0 0.0
    %1012 = vmatpush1.msra.mxu0 0.0
    %1013 = vmatprep.subr.mxu0 0.0
    %1014 = vmatpush1.msra.mxu0 0.0
    %1015 = vmatprep.subr.mxu0 0.0
    %1016 = vmatpush1.msra.mxu0 0.0
    %1017 = vmatprep.subr.mxu0 0.0
    %1018 = vmatpush1.msra.mxu0 0.0
    %1019 = vmatprep.subr.mxu0 0.0
    %1020 = vmatpush1.msra.mxu0 0.0
    %1021 = vmatprep.subr.mxu0 0.0
    %1022 = vmatpush1.msra.mxu0 0.0
    %1023 = vmatprep.subr.mxu0 0.0
    %1024 = vmatpush1.msra.mxu0 0.0
    %1025 = vmatprep.subr.mxu0 0.0
    %1026 = vmatpush1.msra.mxu0 0.0
    %1027 = vmatprep.subr.mxu0 0.0
    %1028 = vmatpush1.msra.mxu0 0.0
    %1029 = vmatprep.subr.mxu0 0.0
    %1030 = vmatpush1.msra.mxu0 0.0
    %1031 = vmatprep.subr.mxu0 0.0
    %1032 = vmatpush1.msra.mxu0 0.0
    %1033 = vmatprep.subr.mxu0 0.0
    %1034 = vmatpush1.msra.mxu0 0.0
    %1035 = vmatprep.mubr.f32.mxu0 0.0
    %1036 = vmatmul.mubr.f32.gmra.mrb[0].mxu0 %v921
    %v1037 = vpop.f32.mrb[0].mxu0
    %v1038 = vadd.f32 %v857, %v1037
    %v1039 = vpop.f32.mrb[0].mxu0
    %1040 = vmatprep.mubr.f32.mxu0 0.0
    %1041 = vmatmul.mubr.f32.gmra.mrb[0].mxu0 %v924
    %v1042 = vpop.f32.mrb[0].mxu0
    %v1043 = vadd.f32 %v860, %v1042
    %v1044 = vpop.f32.mrb[0].mxu0
    %1045 = vmatprep.mubr.f32.mxu0 0.0
    %1046 = vmatmul.mubr.f32.gmra.mrb[0].mxu0 %v927
    %v1047 = vpop.f32.mrb[0].mxu0
    %v1048 = vadd.f32 %v865, %v1047
    %v1049 = vpop.f32.mrb[0].mxu0
    %1050 = vmatprep.mubr.f32.mxu0 0.0
    %1051 = vmatmul.mubr.f32.gmra.mrb[0].mxu0 %v930
    %v1052 = vpop.f32.mrb[0].mxu0
    %v1053 = vadd.f32 %v868, %v1052
    %v1054 = vpop.f32.mrb[0].mxu0
    %1055 = vmatprep.mubr.f32.mxu0 0.0
    %1056 = vmatmul.mubr.f32.gmra.mrb[0].mxu0 %v933
    %v1057 = vpop.f32.mrb[0].mxu0
    %v1058 = vadd.f32 %v873, %v1057
    %v1059 = vpop.f32.mrb[0].mxu0
    %1060 = vmatprep.mubr.f32.mxu0 0.0
    %1061 = vmatmul.mubr.f32.gmra.mrb[0].mxu0 %v936
    %v1062 = vpop.f32.mrb[0].mxu0
    %v1063 = vadd.f32 %v876, %v1062
    %v1064 = vpop.f32.mrb[0].mxu0
    %1065 = vmatprep.mubr.f32.mxu0 0.0
    %1066 = vmatmul.mubr.f32.gmra.mrb[0].mxu0 %v939
    %v1067 = vpop.f32.mrb[0].mxu0
    %v1068 = vadd.f32 %v881, %v1067
    %v1069 = vpop.f32.mrb[0].mxu0
    %1070 = vmatprep.mubr.f32.mxu0 0.0
    %1071 = vmatmul.mubr.f32.gmra.mrb[0].mxu0 %v942
    %v1072 = vpop.f32.mrb[0].mxu0
    %v1073 = vadd.f32 %v884, %v1072
    %v1074 = vpop.f32.mrb[0].mxu0
    %1075 = vmatprep.mubr.f32.mxu0 0.0
    %1076 = vmatmul.mubr.f32.gmra.mrb[0].mxu0 %v945
    %v1077 = vpop.f32.mrb[0].mxu0
    %v1078 = vadd.f32 %v889, %v1077
    %v1079 = vpop.f32.mrb[0].mxu0
    %1080 = vmatprep.mubr.f32.mxu0 0.0
    %1081 = vmatmul.mubr.f32.gmra.mrb[0].mxu0 %v948
    %v1082 = vpop.f32.mrb[0].mxu0
    %v1083 = vadd.f32 %v892, %v1082
    %v1084 = vpop.f32.mrb[0].mxu0
    %1085 = vmatprep.mubr.f32.mxu0 0.0
    %1086 = vmatmul.mubr.f32.gmra.mrb[0].mxu0 %v951
    %v1087 = vpop.f32.mrb[0].mxu0
    %v1088 = vadd.f32 %v897, %v1087
    %v1089 = vpop.f32.mrb[0].mxu0
    %1090 = vmatprep.mubr.f32.mxu0 0.0
    %1091 = vmatmul.mubr.f32.gmra.mrb[0].mxu0 %v954
    %v1092 = vpop.f32.mrb[0].mxu0
    %v1093 = vadd.f32 %v900, %v1092
    %v1094 = vpop.f32.mrb[0].mxu0
    %1095 = vmatprep.mubr.f32.mxu0 0.0
    %1096 = vmatmul.mubr.f32.gmra.mrb[0].mxu0 %v957
    %v1097 = vpop.f32.mrb[0].mxu0
    %v1098 = vadd.f32 %v905, %v1097
    %v1099 = vpop.f32.mrb[0].mxu0
    %1100 = vmatprep.mubr.f32.mxu0 0.0
    %1101 = vmatmul.mubr.f32.gmra.mrb[0].mxu0 %v960
    %v1102 = vpop.f32.mrb[0].mxu0
    %v1103 = vadd.f32 %v908, %v1102
    %v1104 = vpop.f32.mrb[0].mxu0
    %1105 = vmatprep.mubr.f32.mxu0 0.0
    %1106 = vmatmul.mubr.f32.gmra.mrb[0].mxu0 %v963
    %v1107 = vpop.f32.mrb[0].mxu0
    %v1108 = vadd.f32 %v913, %v1107
    %v1109 = vpop.f32.mrb[0].mxu0
    %1110 = vmatprep.mubr.f32.mxu0 0.0
    %1111 = vmatmul.mubr.f32.gmra.mrb[0].mxu0 %v966
    %v1112 = vpop.f32.mrb[0].mxu0
    %v1113 = vadd.f32 %v916, %v1112
    %v1114 = vpop.f32.mrb[0].mxu0
    %1115 = vdwg.mxu0
    %1132 = vrot.lane.b32.xlu0 %v857, 119
    %v1133 = vpop.permute.xlu0 %1132
    %1134 = vrot.lane.b32.xlu0 %v860, 119
    %v1135 = vpop.permute.xlu0 %1134
    %1136 = vrot.lane.b32.xlu0 %v865, 119
    %v1137 = vpop.permute.xlu0 %1136
    %1138 = vrot.lane.b32.xlu0 %v868, 119
    %v1139 = vpop.permute.xlu0 %1138
    %1140 = vrot.lane.b32.xlu0 %v873, 119
    %v1141 = vpop.permute.xlu0 %1140
    %1142 = vrot.lane.b32.xlu0 %v876, 119
    %v1143 = vpop.permute.xlu0 %1142
    %1144 = vrot.lane.b32.xlu0 %v881, 119
    %v1145 = vpop.permute.xlu0 %1144
    %1146 = vrot.lane.b32.xlu0 %v884, 119
    %v1147 = vpop.permute.xlu0 %1146
    %1148 = vrot.lane.b32.xlu0 %v889, 119
    %v1149 = vpop.permute.xlu0 %1148
    %1150 = vrot.lane.b32.xlu0 %v892, 119
    %v1151 = vpop.permute.xlu0 %1150
    %1152 = vrot.lane.b32.xlu0 %v897, 119
    %v1153 = vpop.permute.xlu0 %1152
    %1154 = vrot.lane.b32.xlu0 %v900, 119
    %v1155 = vpop.permute.xlu0 %1154
    %1156 = vrot.lane.b32.xlu0 %v905, 119
    %v1157 = vpop.permute.xlu0 %1156
    %1158 = vrot.lane.b32.xlu0 %v908, 119
    %v1159 = vpop.permute.xlu0 %1158
    %1160 = vrot.lane.b32.xlu0 %v913, 119
    %v1161 = vpop.permute.xlu0 %1160
    %1162 = vrot.lane.b32.xlu0 %v916, 119
    %v1163 = vpop.permute.xlu0 %1162
    %v1180 = vadd.f32 %v1038, %v1133
    %v1181 = vadd.f32 %v1043, %v1135
    %v1182 = vadd.f32 %v1048, %v1137
    %v1183 = vadd.f32 %v1053, %v1139
    %v1184 = vadd.f32 %v1058, %v1141
    %v1185 = vadd.f32 %v1063, %v1143
    %v1186 = vadd.f32 %v1068, %v1145
    %v1187 = vadd.f32 %v1073, %v1147
    %v1188 = vadd.f32 %v1078, %v1149
    %v1189 = vadd.f32 %v1083, %v1151
    %v1190 = vadd.f32 %v1088, %v1153
    %v1191 = vadd.f32 %v1093, %v1155
    %v1192 = vadd.f32 %v1098, %v1157
    %v1193 = vadd.f32 %v1103, %v1159
    %v1194 = vadd.f32 %v1108, %v1161
    %v1195 = vadd.f32 %v1113, %v1163
    %v1196 = vlaneseq
    %v1197 = vand.u32 %v1196, 127
    %vm1198 = vcmp.eq.s32.totalorder %v1197, 8
    %v1199 = vsel %vm1198, 1.0, %v1180
    %v1200 = vsel %vm1198, 1.0, %v1181
    %v1201 = vsel %vm1198, 1.0, %v1182
    %v1202 = vsel %vm1198, 1.0, %v1183
    %v1203 = vsel %vm1198, 1.0, %v1184
    %v1204 = vsel %vm1198, 1.0, %v1185
    %v1205 = vsel %vm1198, 1.0, %v1186
    %v1206 = vsel %vm1198, 1.0, %v1187
    %v1207 = vsel %vm1198, 1.0, %v1188
    %v1208 = vsel %vm1198, 1.0, %v1189
    %v1209 = vsel %vm1198, 1.0, %v1190
    %v1210 = vsel %vm1198, 1.0, %v1191
    %v1211 = vsel %vm1198, 1.0, %v1192
    %v1212 = vsel %vm1198, 1.0, %v1193
    %v1213 = vsel %vm1198, 1.0, %v1194
    %v1214 = vsel %vm1198, 1.0, %v1195
    %v1215 = vmul.f32 %v1180, %v1199
    %v1216 = vmul.f32 %v1181, %v1200
    %v1217 = vmul.f32 %v1182, %v1201
    %v1218 = vmul.f32 %v1183, %v1202
    %v1219 = vmul.f32 %v1184, %v1203
    %v1220 = vmul.f32 %v1185, %v1204
    %v1221 = vmul.f32 %v1186, %v1205
    %v1222 = vmul.f32 %v1187, %v1206
    %v1223 = vmul.f32 %v1188, %v1207
    %v1224 = vmul.f32 %v1189, %v1208
    %v1225 = vmul.f32 %v1190, %v1209
    %v1226 = vmul.f32 %v1191, %v1210
    %v1227 = vmul.f32 %v1192, %v1211
    %v1228 = vmul.f32 %v1193, %v1212
    %v1229 = vmul.f32 %v1194, %v1213
    %v1230 = vmul.f32 %v1195, %v1214
    %vm1231 = vcmask 72704
    %v1233 = vsel %vm1231, 1.0, 0
    %v1236 = vsel %vm1231, %v1215, 0
    %v1239 = vsel %vm1231, %v1216, 0
    %v1242 = vsel %vm1231, %v1217, 0
    %v1245 = vsel %vm1231, %v1218, 0
    %v1248 = vsel %vm1231, %v1219, 0
    %v1251 = vsel %vm1231, %v1220, 0
    %v1254 = vsel %vm1231, %v1221, 0
    %v1257 = vsel %vm1231, %v1222, 0
    %v1260 = vsel %vm1231, %v1223, 0
    %v1263 = vsel %vm1231, %v1224, 0
    %v1266 = vsel %vm1231, %v1225, 0
    %v1269 = vsel %vm1231, %v1226, 0
    %v1272 = vsel %vm1231, %v1227, 0
    %v1275 = vsel %vm1231, %v1228, 0
    %v1278 = vsel %vm1231, %v1229, 0
    %v1281 = vsel %vm1231, %v1230, 0
    %1283 = vmatprep.subr.mxu0 0.0
    %1284 = vmatpush1.xpose.msra.mxu0 %v1236
    %1285 = vmatprep.subr.mxu0 0.0
    %1286 = vmatpush1.xpose.msra.mxu0 %v1239
    %1287 = vmatprep.subr.mxu0 0.0
    %1288 = vmatpush1.xpose.msra.mxu0 %v1242
    %1289 = vmatprep.subr.mxu0 0.0
    %1290 = vmatpush1.xpose.msra.mxu0 %v1245
    %1291 = vmatprep.subr.mxu0 0.0
    %1292 = vmatpush1.xpose.msra.mxu0 %v1248
    %1293 = vmatprep.subr.mxu0 0.0
    %1294 = vmatpush1.xpose.msra.mxu0 %v1251
    %1295 = vmatprep.subr.mxu0 0.0
    %1296 = vmatpush1.xpose.msra.mxu0 %v1254
    %1297 = vmatprep.subr.mxu0 0.0
    %1298 = vmatpush1.xpose.msra.mxu0 %v1257
    %1299 = vmatprep.subr.mxu0 0.0
    %1300 = vmatpush1.xpose.msra.mxu0 %v1260
    %1301 = vmatprep.subr.mxu0 0.0
    %1302 = vmatpush1.xpose.msra.mxu0 %v1263
    %1303 = vmatprep.subr.mxu0 0.0
    %1304 = vmatpush1.xpose.msra.mxu0 %v1266
    %1305 = vmatprep.subr.mxu0 0.0
    %1306 = vmatpush1.xpose.msra.mxu0 %v1269
    %1307 = vmatprep.subr.mxu0 0.0
    %1308 = vmatpush1.xpose.msra.mxu0 %v1272
    %1309 = vmatprep.subr.mxu0 0.0
    %1310 = vmatpush1.xpose.msra.mxu0 %v1275
    %1311 = vmatprep.subr.mxu0 0.0
    %1312 = vmatpush1.xpose.msra.mxu0 %v1278
    %1313 = vmatprep.subr.mxu0 0.0
    %1314 = vmatpush1.xpose.msra.mxu0 %v1281
    %1315 = vmatprep.subr.mxu0 0.0
    %1316 = vmatpush1.xpose.msra.mxu0 0.0
    %1317 = vmatprep.subr.mxu0 0.0
    %1318 = vmatpush1.xpose.msra.mxu0 0.0
    %1319 = vmatprep.subr.mxu0 0.0
    %1320 = vmatpush1.xpose.msra.mxu0 0.0
    %1321 = vmatprep.subr.mxu0 0.0
    %1322 = vmatpush1.xpose.msra.mxu0 0.0
    %1323 = vmatprep.subr.mxu0 0.0
    %1324 = vmatpush1.xpose.msra.mxu0 0.0
    %1325 = vmatprep.subr.mxu0 0.0
    %1326 = vmatpush1.xpose.msra.mxu0 0.0
    %1327 = vmatprep.subr.mxu0 0.0
    %1328 = vmatpush1.xpose.msra.mxu0 0.0
    %1329 = vmatprep.subr.mxu0 0.0
    %1330 = vmatpush1.xpose.msra.mxu0 0.0
    %1331 = vmatprep.subr.mxu0 0.0
    %1332 = vmatpush1.xpose.msra.mxu0 0.0
    %1333 = vmatprep.subr.mxu0 0.0
    %1334 = vmatpush1.xpose.msra.mxu0 0.0
    %1335 = vmatprep.subr.mxu0 0.0
    %1336 = vmatpush1.xpose.msra.mxu0 0.0
    %1337 = vmatprep.subr.mxu0 0.0
    %1338 = vmatpush1.xpose.msra.mxu0 0.0
    %1339 = vmatprep.subr.mxu0 0.0
    %1340 = vmatpush1.xpose.msra.mxu0 0.0
    %1341 = vmatprep.subr.mxu0 0.0
    %1342 = vmatpush1.xpose.msra.mxu0 0.0
    %1343 = vmatprep.subr.mxu0 0.0
    %1344 = vmatpush1.xpose.msra.mxu0 0.0
    %1345 = vmatprep.subr.mxu0 0.0
    %1346 = vmatpush1.xpose.msra.mxu0 0.0
    %1347 = vmatprep.mubr.f32.mxu0 0.0
    %1348 = vmatmul.mubr.f32.gmra.mrb[0].mxu0 %v1233
    %v1349 = vpop.f32.mrb[0].mxu0
    %v1350 = vadd.f32 0.0, %v1349
    %v1351 = vpop.f32.mrb[0].mxu0
    %1352 = vdwg.mxu0
    %s1353 = sld [smem:[#allocation2]]
    %v1354 = vstv %s1353
    %v1355 = vadd.f32 %v1350, %v1354
    %v1356 = vxor.u32 %v1355, 2147483648
    %v1357 = vmul.f32 %v1356, 1.442695
    %v1358 = vpow.pop %v1357
    %v1359 = vadd.f32 %v1358, 1.0
    %v1360 = vrcp.pop %v1359
    %v1361 = vmul.f32 1.0, %v1360
    %1362 = vst [vmem:[#allocation3] sm:$0x1] %v1361
    // Predicated region
    $region26: #{tpu_custom_call.1} parent=1 // pred_check
      _
    $region27: #{tpu_custom_call.1} parent=1 // pred_check_branch
      %1364 = sbr.rel (0) target = $region29
    $region28: #{tpu_custom_call.1} parent=1 // pred_region
      %s1366 = ssub.s32 16, 16
      %1367 = vsyncadd [#allocation4], %s1366
      %s1369 = sshll.u32 [#allocation3], 4
      %s1370 = int_to_ptr.vmem [resolvable:$true] %s1369
      %1372 = dma.vmem_to_hbm [thread:$0]  %s1370, 16, %s6, [#allocation4]
    $region29: #{tpu_custom_call.1} parent=1 // pred_fallthru
      _
    // Predicated region
    $region30: #{tpu_custom_call.1} parent=1 // pred_check
      _
    $region31: #{tpu_custom_call.1} parent=1 // pred_check_branch
      %1374 = sbr.rel (0) target = $region33
    $region32: #{tpu_custom_call.1} parent=1 // pred_region
      %1375 = dma.done [#allocation4], 16
    $region33: #{tpu_custom_call.1} parent=1 // pred_fallthru
      _
    %1376 = vsyncpa [#allocation4], 1

</llo_original>
